<compile_context>
chip_gen: v5e
topology: v5e:2x2
jax: 0.10.0
libtpu: 0.0.40
codegen_flags: <defaults>
</compile_context>

<pallas_src>
import functools

import jax
import jax.numpy as jnp
from jax.experimental import pallas as pl
from jax.experimental.pallas import tpu as pltpu


def _netlin_kernel(c_in, c_out, w_ref, x_ref, o_ref):
    # w_ref: SMEM (C_out, C_in) f32 scalar weights.
    # x_ref: VMEM (1, C_in, t_hw) tile of channel planes for one batch element.
    # o_ref: VMEM (1, C_out, t_hw) lane-dense output tile.
    x = x_ref[0].astype(jnp.float32)                      # (C_in, t_hw)
    for o in range(c_out):
        acc = x[0:1, :] * w_ref[o, 0]                     # (1, t_hw) VPU FMA chain
        for c in range(1, c_in):
            acc = acc + x[c:c + 1, :] * w_ref[o, c]
        o_ref[0, o:o + 1, :] = acc.astype(o_ref.dtype)


def _pick_hw_tile(hw, c_in, itemsize, target_bytes=1 << 20):
    """Largest lane tile (multiple of 128 dividing hw) with ~<=1 MiB of input."""
    if hw % 128 != 0:
        return hw                        # small/odd spatial maps: full extent
    t = (target_bytes // max(1, c_in * itemsize)) // 128 * 128
    t = max(128, min(t, hw))
    while hw % t != 0:                   # terminates at 128 (divides hw)
        t -= 128
    return t


def netlin_layer(x_nchw, weight):
    """1x1 conv, no bias.

    x_nchw: (N, C_in, H, W)
    weight: (C_out, C_in, 1, 1)  -- PyTorch Conv2d weight layout
    returns: (N, C_out, H, W)
    """
    N, C_in, H, W = x_nchw.shape
    C_out = weight.shape[0]
    HW = H * W

    x3 = x_nchw.reshape(N, C_in, HW)                # free reshape (NCHW-native)
    w2 = weight[:, :, 0, 0].astype(jnp.float32)     # (C_out, C_in) scalars

    t_hw = _pick_hw_tile(HW, C_in, x3.dtype.itemsize)
    grid = (N, HW // t_hw)

    # Explicit VMEM budget: 2x double-buffered (in + out) tiles plus headroom,
    # capped at 32 MiB so it is safe on v5e/v6e/v7x alike.
    in_tile = C_in * t_hw * x3.dtype.itemsize
    out_tile = C_out * t_hw * x3.dtype.itemsize
    vmem_limit = int(min(32 * 1024 * 1024,
                         max(8 * 1024 * 1024, 6 * (in_tile + out_tile))))

    out3 = pl.pallas_call(
        functools.partial(_netlin_kernel, C_in, C_out),
        out_shape=jax.ShapeDtypeStruct((N, C_out, HW), x3.dtype),
        grid_spec=pltpu.PrefetchScalarGridSpec(
            num_scalar_prefetch=0,
            grid=grid,
            in_specs=[
                pl.BlockSpec(memory_space=pltpu.MemorySpace.SMEM),      # weights
                pl.BlockSpec((1, C_in, t_hw), lambda n, j: (n, 0, j)),  # x planes
            ],
            out_specs=pl.BlockSpec((1, C_out, t_hw), lambda n, j: (n, 0, j)),
        ),
        compiler_params=pltpu.CompilerParams(
            dimension_semantics=("parallel", "parallel"),
            vmem_limit_bytes=vmem_limit,
        ),
    )(w2, x3)

    return out3.reshape(N, C_out, H, W)             # free reshape back to NCHW


if __name__ == "__main__":
    key = jax.random.PRNGKey(0)
    kx, kw = jax.random.split(key)

    N, C_in, H, W = 2, 4, 16, 16
    C_out = 1

    x = jax.random.normal(kx, (N, C_in, H, W), dtype=jnp.float32)
    # Deterministic Conv2d weight, shape (chn_out, chn_in, 1, 1), no bias.
    weight = jax.random.normal(kw, (C_out, C_in, 1, 1), dtype=jnp.float32) * 0.1

    out = netlin_layer(x, weight)
    jax.block_until_ready(out)

    # Reference check (1x1 conv == channel contraction at each pixel).
    ref = jnp.einsum("nchw,oc->nohw", x, weight[:, :, 0, 0])
    assert out.shape == (N, C_out, H, W)
    assert jnp.allclose(out, ref, atol=1e-5, rtol=1e-5)

    print("KERNEL_OK")
</pallas_src>

<mosaic_0001>
module attributes {stable_mosaic.version = 11 : i64} {
  func.func @_netlin_kernel(%arg0: i32, %arg1: i32, %arg2: memref<1x4xf32, #tpu.memory_space<smem>>, %arg3: memref<1x4x256xf32, #tpu.memory_space<vmem>>, %arg4: memref<1x1x256xf32, #tpu.memory_space<vmem>>) attributes {dimension_semantics = [#tpu.dimension_semantics<parallel>, #tpu.dimension_semantics<parallel>], iteration_bounds = array<i64: 2, 1>, scalar_prefetch = 0 : i64, scratch_operands = 0 : i64, tpu.core_type = #tpu.core_type<tc>, window_params = [{transform_indices = @transform_0, window_bounds = array<i64: 1, 4>}, {transform_indices = @transform_1, window_bounds = array<i64: 1, 4, 256>}, {transform_indices = @transform_2, window_bounds = array<i64: 1, 1, 256>}]} {
    %c0 = arith.constant 0 : index
    %c0_0 = arith.constant 0 : index
    %c0_1 = arith.constant 0 : index
    %0 = vector.load %arg3[%c0, %c0_0, %c0_1] : memref<1x4x256xf32, #tpu.memory_space<vmem>>, vector<1x4x256xf32>
    %1 = vector.shape_cast %0 : vector<1x4x256xf32> to vector<4x256xf32>
    %2 = vector.extract_strided_slice %1 {offsets = [0, 0], sizes = [1, 256], strides = [1, 1]} : vector<4x256xf32> to vector<1x256xf32>
    %c0_2 = arith.constant 0 : index
    %c0_3 = arith.constant 0 : index
    %3 = memref.load %arg2[%c0_2, %c0_3] : memref<1x4xf32, #tpu.memory_space<smem>>
    %4 = vector.broadcast %3 : f32 to vector<1x256xf32>
    %5 = arith.mulf %2, %4 : vector<1x256xf32>
    %6 = vector.extract_strided_slice %1 {offsets = [1, 0], sizes = [1, 256], strides = [1, 1]} : vector<4x256xf32> to vector<1x256xf32>
    %c0_4 = arith.constant 0 : index
    %c1 = arith.constant 1 : index
    %7 = memref.load %arg2[%c0_4, %c1] : memref<1x4xf32, #tpu.memory_space<smem>>
    %8 = vector.broadcast %7 : f32 to vector<1x256xf32>
    %9 = arith.mulf %6, %8 : vector<1x256xf32>
    %10 = arith.addf %5, %9 : vector<1x256xf32>
    %11 = vector.extract_strided_slice %1 {offsets = [2, 0], sizes = [1, 256], strides = [1, 1]} : vector<4x256xf32> to vector<1x256xf32>
    %c0_5 = arith.constant 0 : index
    %c2 = arith.constant 2 : index
    %12 = memref.load %arg2[%c0_5, %c2] : memref<1x4xf32, #tpu.memory_space<smem>>
    %13 = vector.broadcast %12 : f32 to vector<1x256xf32>
    %14 = arith.mulf %11, %13 : vector<1x256xf32>
    %15 = arith.addf %10, %14 : vector<1x256xf32>
    %16 = vector.extract_strided_slice %1 {offsets = [3, 0], sizes = [1, 256], strides = [1, 1]} : vector<4x256xf32> to vector<1x256xf32>
    %c0_6 = arith.constant 0 : index
    %c3 = arith.constant 3 : index
    %17 = memref.load %arg2[%c0_6, %c3] : memref<1x4xf32, #tpu.memory_space<smem>>
    %18 = vector.broadcast %17 : f32 to vector<1x256xf32>
    %19 = arith.mulf %16, %18 : vector<1x256xf32>
    %20 = arith.addf %15, %19 : vector<1x256xf32>
    %c0_7 = arith.constant 0 : index
    %c0_8 = arith.constant 0 : index
    %c0_9 = arith.constant 0 : index
    %21 = vector.load %arg4[%c0_7, %c0_8, %c0_9] : memref<1x1x256xf32, #tpu.memory_space<vmem>>, vector<1x1x256xf32>
    %22 = vector.shape_cast %21 : vector<1x1x256xf32> to vector<1x256xf32>
    %23 = vector.shape_cast %20 : vector<1x256xf32> to vector<1x1x256xf32>
    tpu.vector_store %arg4[%c0_7, %c0_8, %c0_9], %23 {strides = array<i32>} : memref<1x1x256xf32, #tpu.memory_space<vmem>>, vector<1x1x256xf32>,
    return
  }
  func.func @transform_0(%arg0: i32, %arg1: i32) -> (i32, i32) {
    %c0_i32 = arith.constant 0 : i32
    %c0_i32_0 = arith.constant 0 : i32
    %c0_i32_1 = arith.constant 0 : i32
    return %c0_i32, %c0_i32_0 : i32, i32
  }
  func.func @transform_1(%arg0: i32, %arg1: i32) -> (i32, i32, i32) {
    %c0_i32 = arith.constant 0 : i32
    %c0_i32_0 = arith.constant 0 : i32
    return %arg0, %c0_i32, %arg1 : i32, i32, i32
  }
  func.func @transform_2(%arg0: i32, %arg1: i32) -> (i32, i32, i32) {
    %c0_i32 = arith.constant 0 : i32
    %c0_i32_0 = arith.constant 0 : i32
    return %arg0, %c0_i32, %arg1 : i32, i32, i32
  }
}

</mosaic_0001>

<llo_original>
// kernel: tpu_custom_call.1
$region0: #{tpu_custom_call.1}
  #allocation0 [shape = 'u32[]', space=smem, size = 0x4, offset = 0x4, fixed_abs, tag = 'smem constant byte address 0x4 - core index']
  #allocation1 [shape = 'u32[72,128]{1,0:T(1,128)}', space=vmem, size = 0x9000, scoped, tag = 'internal scratch']
  %s0 = inlined_call_operand.hbm [shape: f32[1,4], index: 0, kind: input, shape index: {}]
  %s1 = inlined_call_operand.hbm [shape: f32[2,4,256], index: 1, kind: input, shape index: {}]
  %s2 = inlined_call_operand.hbm [shape: f32[2,1,256], index: 2, kind: output, shape index: {}]
  %s3 = sld [smem:[#allocation0]]
  $region49: #{tpu_custom_call.1} parent=0
    _
  %s5 = ssub.s32 1, %s3
  %s6 = scalar_select 0, %s5, %s3
  $region1: #{tpu_custom_call.1} parent=0
    #allocation2 [shape = 'u8[512]{0}', space=smem, size = 0x200, scoped, tag = 'input window, operand 0, single buffered']
    #allocation3 [shape = 's32[2]{0}', space=sflag, size = 0x8, scoped, tag = 'scoped memory for tpu_custom_call.1']
    #allocation4 [shape = 's32[2]{0}', space=sflag, size = 0x8, scoped, tag = 'scoped memory for tpu_custom_call.1']
    #allocation5 [shape = 's32[2]{0}', space=sflag, size = 0x8, scoped, tag = 'scoped memory for tpu_custom_call.1']
    #allocation6 [shape = 'u8[8192]{0}', space=vmem, size = 0x2000, scoped, tag = 'input window, operand 1']
    #allocation7 [shape = 'u8[2048]{0}', space=vmem, size = 0x800, scoped, tag = 'output window, operand 0']
    %7 = vsyncpa [#allocation5], 0
    %8 = vsyncpa [#allocation3], 0
    %s9 = scalar_lea.sflag [#allocation3], 1
    %10 = vsyncpa %s9, 0
    %11 = vsyncpa [#allocation4], 0
    %s12 = scalar_lea.sflag [#allocation4], 1
    %13 = vsyncpa %s12, 0
    loop: start=0, step=1, limit=4
    $region2: #{tpu_custom_call.1} parent=1 // loop_pre_header
      _
    $region3: #{tpu_custom_call.1} parent=1 // loop_header
      %s15 = sphi 0, %s19
      %p16 = scmp.ge.s32.totalorder %s15, 4
      %s22 = sphi 0, %s34
      %s23 = sphi 0, %s30
      %s24 = sphi 0, %s22
      %s25 = sphi 0, %s23
      %s26 = sphi 0, %s24
      %s27 = sphi 0, %s25
      %s35 = sphi 0, %s35
      %s37 = sphi 0, %s35
      %s38 = sphi 0, %s37
      %s52 = sphi 0, %s38
      %s60 = sphi 0, %s62
      %s63 = sphi 0, %s60
      %s64 = sphi 0, %s63
      %s80 = sphi 0, %s64
      %s88 = sphi 0, %s90
      %s91 = sphi 0, %s88
      %s92 = sphi 0, %s91
      %s108 = sphi 0, %s92
    $region4: #{tpu_custom_call.1} parent=1 // loop_header_branch
      %18 = sbr.rel (%p16) target = $region8
    $region5: #{tpu_custom_call.1} parent=1 // loop_body
      %s20 = ssub.s32 %s15, 1
      %s21 = ssub.s32 %s15, 2
      %s28 = sadd.s32 1, %s23
      %p29 = scmp.ge.s32.totalorder %s28, 1
      %s30 = scalar_select %p29, 0, %s28
      %s31 = sadd.s32 1, %s22
      %s32 = scalar_select %p29, %s31, %s22
      %p33 = scmp.ge.s32.totalorder %s32, 2
      %s34 = scalar_select %p33, 0, %s32
      %s36 = sadd.s32 %s35, 1
      %p39 = scmp.eq.s32.totalorder %s15, 1
      %p40 = scmp.ne.s32.totalorder %s35, %s37
      %p41 = scmp.eq.s32.totalorder %s15, 0
      %p42 = por %p40, %p41
      %p43 = scmp.ne.s32.totalorder %s35, %s37
      %p44 = scmp.eq.s32.totalorder %s20, 1
      %p45 = por %p43, %p44
      %p46 = scmp.ne.s32.totalorder %s37, %s38
      %p47 = scmp.eq.s32.totalorder %s20, 0
      %p48 = por %p46, %p47
      %p49 = scmp.ne.s32.totalorder %s37, %s38
      %p50 = scmp.eq.s32.totalorder %s21, 1
      %p51 = por %p49, %p50
      %p53 = scmp.ne.s32.totalorder %s38, %s52
      %p54 = scmp.eq.s32.totalorder %s21, 0
      %p55 = por %p53, %p54
      %s56 = ssub.s32 %s22, %s34
      %s57 = ssub.s32 %s23, %s30
      %s58 = sor.u32 %s56, %s57
      %p59 = scmp.eq.s32.totalorder %s58, 0
      %s61 = sadd.s32 %s60, 1
      %s62 = scalar_select %p59, %s60, %s61
      %p65 = pneg %p59
      %p66 = scmp.eq.s32.totalorder %s15, 1
      %p67 = por %p65, %p66
      %p68 = scmp.ne.s32.totalorder %s60, %s63
      %p69 = scmp.eq.s32.totalorder %s15, 0
      %p70 = por %p68, %p69
      %p71 = scmp.ne.s32.totalorder %s60, %s63
      %p72 = scmp.eq.s32.totalorder %s20, 1
      %p73 = por %p71, %p72
      %p74 = scmp.ne.s32.totalorder %s63, %s64
      %p75 = scmp.eq.s32.totalorder %s20, 0
      %p76 = por %p74, %p75
      %p77 = scmp.ne.s32.totalorder %s63, %s64
      %p78 = scmp.eq.s32.totalorder %s21, 1
      %p79 = por %p77, %p78
      %p81 = scmp.ne.s32.totalorder %s64, %s80
      %p82 = scmp.eq.s32.totalorder %s21, 0
      %p83 = por %p81, %p82
      %s84 = ssub.s32 %s22, %s34
      %s85 = ssub.s32 %s23, %s30
      %s86 = sor.u32 %s84, %s85
      %p87 = scmp.eq.s32.totalorder %s86, 0
      %s89 = sadd.s32 %s88, 1
      %s90 = scalar_select %p87, %s88, %s89
      %p93 = pneg %p87
      %p94 = scmp.eq.s32.totalorder %s15, 1
      %p95 = por %p93, %p94
      %p96 = scmp.ne.s32.totalorder %s88, %s91
      %p97 = scmp.eq.s32.totalorder %s15, 0
      %p98 = por %p96, %p97
      %p99 = scmp.ne.s32.totalorder %s88, %s91
      %p100 = scmp.eq.s32.totalorder %s20, 1
      %p101 = por %p99, %p100
      %p102 = scmp.ne.s32.totalorder %s91, %s92
      %p103 = scmp.eq.s32.totalorder %s20, 0
      %p104 = por %p102, %p103
      %p105 = scmp.ne.s32.totalorder %s91, %s92
      %p106 = scmp.eq.s32.totalorder %s21, 1
      %p107 = por %p105, %p106
      %p109 = scmp.ne.s32.totalorder %s92, %s108
      %p110 = scmp.eq.s32.totalorder %s21, 0
      %p111 = por %p109, %p110
      %p112 = scmp.le.s32.totalorder 1, %s15
      %p113 = scmp.lt.s32.totalorder %s15, 3
      %p114 = pnand %p112, %p113
      %p115 = pneg %p114
      // Predicated region
      $region9: #{tpu_custom_call.1} parent=5 // pred_check
        _
      $region10: #{tpu_custom_call.1} parent=5 // pred_check_branch
        %117 = sbr.rel (%p114) target = $region12
      $region11: #{tpu_custom_call.1} parent=5 // pred_region
        %s118 = ssub.s32 %s15, 1
        // Predicated region
        $region13: #{tpu_custom_call.1} parent=11 // pred_check
          %p119 = pneg %p48
        $region14: #{tpu_custom_call.1} parent=11 // pred_check_branch
          %121 = sbr.rel (%p119) target = $region16
        $region15: #{tpu_custom_call.1} parent=11 // pred_region
          %123 = vsyncadd [#allocation5], 0
          %s125 = sshll.u32 %s0, 4
          %s126 = int_to_ptr.hbm [resolvable:$true] %s125
          %128 = dma.hbm_to_smem %s126, 16, [#allocation2], [#allocation5]
        $region16: #{tpu_custom_call.1} parent=11 // pred_fallthru
          _
      $region12: #{tpu_custom_call.1} parent=5 // pred_fallthru
        _
      %p129 = scmp.lt.s32.totalorder %s15, 2
      // Predicated region
      $region17: #{tpu_custom_call.1} parent=5 // pred_check
        %p130 = pneg %p129
      $region18: #{tpu_custom_call.1} parent=5 // pred_check_branch
        %132 = sbr.rel (%p130) target = $region20
      $region19: #{tpu_custom_call.1} parent=5 // pred_region
        // Predicated region
        $region21: #{tpu_custom_call.1} parent=19 // pred_check
          %p133 = pneg %p70
        $region22: #{tpu_custom_call.1} parent=19 // pred_check_branch
          %135 = sbr.rel (%p133) target = $region24
        $region23: #{tpu_custom_call.1} parent=19 // pred_region
          %s136 = sand.u32 %s60, 1
          %s137 = scalar_lea.sflag [#allocation3], %s136
          %s138 = sand.u32 %s60, 1
          %s139 = smul.addr %s138, 8
          %s140 = scalar_lea.vmem [#allocation6], %s139
          %s141 = smul.u32 2, %s23
          %143 = vsyncadd %s137, 0
          %s144 = smul.addr %s22, 2
          %s145 = sadd.s32 %s141, %s144
          %s146 = smul.addr %s145, 4
          %s147 = scalar_lea.hbm %s1, %s146
          %s149 = sshll.u32 %s147, 4
          %s150 = int_to_ptr.hbm [resolvable:$true] %s149
          %s151 = sshll.u32 %s140, 4
          %s152 = int_to_ptr.vmem [resolvable:$true] %s151
          %154 = dma.hbm_to_vmem [thread:$0]  %s150, 128, %s152, %s137
        $region24: #{tpu_custom_call.1} parent=19 // pred_fallthru
          _
      $region20: #{tpu_custom_call.1} parent=5 // pred_fallthru
        _
      %p155 = scmp.le.s32.totalorder 1, %s15
      %p156 = scmp.lt.s32.totalorder %s15, 3
      %p157 = pnand %p155, %p156
      %p158 = pneg %p157
      // Predicated region
      $region25: #{tpu_custom_call.1} parent=5 // pred_check
        _
      $region26: #{tpu_custom_call.1} parent=5 // pred_check_branch
        %160 = sbr.rel (%p157) target = $region28
      $region27: #{tpu_custom_call.1} parent=5 // pred_region
        %s161 = ssub.s32 %s15, 1
        // Predicated region
        $region29: #{tpu_custom_call.1} parent=27 // pred_check
          %p162 = pneg %p48
        $region30: #{tpu_custom_call.1} parent=27 // pred_check_branch
          %164 = sbr.rel (%p162) target = $region32
        $region31: #{tpu_custom_call.1} parent=27 // pred_region
          %166 = dma.done [#allocation5], 16
        $region32: #{tpu_custom_call.1} parent=27 // pred_fallthru
          _
        %s167 = sand.u32 %s63, 1
        %s168 = scalar_lea.sflag [#allocation3], %s167
        %s169 = sand.u32 %s63, 1
        %s170 = smul.addr %s169, 8
        %s171 = scalar_lea.vmem [#allocation6], %s170
        // Predicated region
        $region33: #{tpu_custom_call.1} parent=27 // pred_check
          %p172 = pneg %p76
        $region34: #{tpu_custom_call.1} parent=27 // pred_check_branch
          %174 = sbr.rel (%p172) target = $region36
        $region35: #{tpu_custom_call.1} parent=27 // pred_region
          %176 = dma.done %s168, 128
        $region36: #{tpu_custom_call.1} parent=27 // pred_fallthru
          _
        %177 = sfence
        %p178 = pneg %p48
        %p179 = pneg %p45
        %s180 = sand.u32 %s63, 1
        %s181 = scalar_lea.sflag [#allocation3], %s180
        %s182 = sand.u32 %s63, 1
        %s183 = smul.addr %s182, 8
        %s184 = scalar_lea.vmem [#allocation6], %s183
        %p185 = pneg %p76
        %p186 = pneg %p73
        %p187 = pneg %p104
        %p188 = pneg %p101
        %s189 = sand.u32 %s91, 1
        %s190 = scalar_lea.sflag [#allocation4], %s189
        %s191 = sand.u32 %s91, 1
        %s192 = smul.addr %s191, 2
        %s193 = scalar_lea.vmem [#allocation7], %s192
        %s194 = smul.u32 2, %s25
        %s195 = smul.u32 2, %s25
        %v196 = vld [vmem:[%s171] sm:$0xff]
        %s197 = sld [smem:[#allocation2]]
        %v198 = vstv %s197
        %v199 = vmul.f32 %v196, %v198
        %s200 = sld [smem:[#allocation2 + $0x1]]
        %v201 = vstv %s200
        %v202 = vmul.f32 %v196, %v201
        %v204 = vrot.slane %v202, 5
        %v205 = vrot.slane %v204, 4
        %v207 = vadd.f32 %v199, %v205
        %s208 = sld [smem:[#allocation2 + $0x2]]
        %v209 = vstv %s208
        %v210 = vmul.f32 %v196, %v209
        %v212 = vrot.slane %v210, 6
        %v213 = vrot.slane %v212, 4
        %v215 = vadd.f32 %v207, %v213
        %s216 = sld [smem:[#allocation2 + $0x3]]
        %v217 = vstv %s216
        %v218 = vmul.f32 %v196, %v217
        %v220 = vrot.slane %v218, 7
        %v221 = vrot.slane %v220, 4
        %v223 = vadd.f32 %v215, %v221
        %v225 = vrot.slane %v223, 3
        %vm226 = vcmask 1040384
        %v227 = vsel %vm226, %v223, %v225
        %v229 = vlaneseq
        %vm230 = vcmp.ge.s32.totalorder %v229, 0
        %vm231 = vcmp.lt.s32.totalorder %v229, 256
        %vm232 = vmand %vm230, %vm231
        %233 = vst.msk [vmem:[%s193] sm:$0x3] %vm232, %v227
        %s234 = sand.u32 %s91, 1
        %s235 = scalar_lea.sflag [#allocation4], %s234
        %s236 = sand.u32 %s91, 1
        %s237 = smul.addr %s236, 2
        %s238 = scalar_lea.vmem [#allocation7], %s237
        // Predicated region
        $region37: #{tpu_custom_call.1} parent=27 // pred_check
          %p239 = pneg %p101
        $region38: #{tpu_custom_call.1} parent=27 // pred_check_branch
          %241 = sbr.rel (%p239) target = $region40
        $region39: #{tpu_custom_call.1} parent=27 // pred_region
          %s242 = smul.u32 2, %s25
          %244 = vsyncadd %s235, 0
          %s245 = smul.addr %s24, 2
          %s246 = sadd.s32 %s242, %s245
          %s247 = scalar_lea.hbm %s2, %s246
          %s249 = sshll.u32 %s238, 4
          %s250 = int_to_ptr.vmem [resolvable:$true] %s249
          %s251 = sshll.u32 %s247, 4
          %s252 = int_to_ptr.hbm [resolvable:$true] %s251
          %254 = dma.vmem_to_hbm [thread:$0]  %s250, 32, %s252, %s235
        $region40: #{tpu_custom_call.1} parent=27 // pred_fallthru
          _
      $region28: #{tpu_custom_call.1} parent=5 // pred_fallthru
        _
      %p255 = scmp.le.s32.totalorder 2, %s15
      // Predicated region
      $region41: #{tpu_custom_call.1} parent=5 // pred_check
        %p256 = pneg %p255
      $region42: #{tpu_custom_call.1} parent=5 // pred_check_branch
        %258 = sbr.rel (%p256) target = $region44
      $region43: #{tpu_custom_call.1} parent=5 // pred_region
        %s259 = ssub.s32 %s15, 2
        // Predicated region
        $region45: #{tpu_custom_call.1} parent=43 // pred_check
          %p260 = pneg %p107
        $region46: #{tpu_custom_call.1} parent=43 // pred_check_branch
          %262 = sbr.rel (%p260) target = $region48
        $region47: #{tpu_custom_call.1} parent=43 // pred_region
          %s263 = sand.u32 %s92, 1
          %s264 = scalar_lea.sflag [#allocation4], %s263
          %s265 = sand.u32 %s92, 1
          %s266 = smul.addr %s265, 2
          %s267 = scalar_lea.vmem [#allocation7], %s266
          %269 = dma.done %s264, 32
        $region48: #{tpu_custom_call.1} parent=43 // pred_fallthru
          _
      $region44: #{tpu_custom_call.1} parent=5 // pred_fallthru
        _
    $region6: #{tpu_custom_call.1} parent=1 // loop_footer
      %s19 = sadd.s32 1, %s15
    $region7: #{tpu_custom_call.1} parent=1 // loop_footer_branch
      %14 = sbr.rel target = $region3
    $region8: #{tpu_custom_call.1} parent=1 // loop_exit
      _
    %270 = vsyncpa [#allocation3], 1
    %s271 = scalar_lea.sflag [#allocation3], 1
    %272 = vsyncpa %s271, 1
    %273 = vsyncpa [#allocation4], 1
    %s274 = scalar_lea.sflag [#allocation4], 1
    %275 = vsyncpa %s274, 1
    %276 = vsyncpa [#allocation5], 1
    %s277 = scalar_lea.sflag [#allocation5], 1
    %278 = vsyncpa %s277, 1

</llo_original>
